<compile_context>
chip_gen: v5e
topology: v5e:2x2
jax: 0.10.0
libtpu: 0.0.40
codegen_flags: <defaults>
</compile_context>

<pallas_src>
import functools

import jax
import jax.numpy as jnp
from jax.experimental import pallas as pl
from jax.experimental.pallas import tpu as pltpu

_MIB = 1 << 20


# ---------------------------------------------------------------------------
# Per-generation tiling configuration.
# ---------------------------------------------------------------------------
def _tpu_generation() -> str:
    try:
        kind = jax.devices()[0].device_kind.lower()
    except Exception:  # pragma: no cover - defensive
        return "unknown"
    if "v5e" in kind or "v5 lite" in kind or "v5lite" in kind:
        return "v5e"
    if "v6" in kind:
        return "v6e"
    if "v7" in kind or "7x" in kind:
        return "v7x"
    return "unknown"


# (tm_pref, tn_pref, tk_pref, vmem_limit_bytes, split_for_megacore)
_TILE_CONFIG = {
    "v5e":     (512,  1024, 512, 64 * _MIB, False),
    "v6e":     (1024, 2048, 512, 64 * _MIB, False),
    "v7x":     (1024, 1024, 512, 48 * _MIB, True),
    "unknown": (512,  1024, 512, 64 * _MIB, True),
}


def _choose_tile(dim: int, pref: int, align: int):
    """Return (tile, padded_dim).

    Small dims use the full extent as the block (exempt from the (8,128)
    divisibility rule). Large dims pick the `align`-multiple tile in
    [pref//4, pref] that minimizes padding (ties -> largest tile), so ragged
    layer sizes don't waste MXU work / HBM traffic on up-to-pref padding.
    """
    if dim <= pref:
        return dim, dim
    lo = max(align, (pref // 4) // align * align)
    best = None  # (padded, -tile, tile)
    for t in range(lo, pref + 1, align):
        padded = -(-dim // t) * t
        key = (padded, -t)
        if best is None or key < best[:2]:
            best = (padded, -t, t)
    return best[2], best[0]


# ---------------------------------------------------------------------------
# Kernel bodies.
# ---------------------------------------------------------------------------
def _make_kernel(multi_k: bool, has_bias: bool):
    """Kernel body for (multi-K-step?, fused bias?). x:[tm,tk], w:[tk,tn]."""
    if multi_k:
        def kernel(*refs):
            if has_bias:
                x_ref, w_ref, b_ref, o_ref, acc_ref = refs
            else:
                x_ref, w_ref, o_ref, acc_ref = refs
                b_ref = None

            part = jnp.dot(x_ref[...], w_ref[...],
                           preferred_element_type=jnp.float32)

            @pl.when(pl.program_id(2) == 0)
            def _():
                acc_ref[...] = part            # no zero-init store + read-add

            @pl.when(pl.program_id(2) != 0)
            def _():
                acc_ref[...] += part

            @pl.when(pl.program_id(2) == pl.num_programs(2) - 1)
            def _():
                acc = acc_ref[...]
                if has_bias:
                    acc = acc + b_ref[...].astype(jnp.float32)
                o_ref[...] = acc.astype(o_ref.dtype)
    else:
        def kernel(*refs):
            if has_bias:
                x_ref, w_ref, b_ref, o_ref = refs
            else:
                x_ref, w_ref, o_ref = refs
                b_ref = None
            acc = jnp.dot(x_ref[...], w_ref[...],
                          preferred_element_type=jnp.float32)
            if has_bias:
                acc = acc + b_ref[...].astype(jnp.float32)
            o_ref[...] = acc.astype(o_ref.dtype)
    return kernel


# ---------------------------------------------------------------------------
# pallas_call wrapper (operates on padded 2-D operands).
# ---------------------------------------------------------------------------
@functools.partial(jax.jit,
                   static_argnames=("tm", "tn", "tk", "has_bias", "vmem_limit"))
def _pallas_linear_2d(x2d, w_kn, bias, *, tm, tn, tk, has_bias, vmem_limit):
    M, K = x2d.shape                   # already padded to tile multiples
    N = w_kn.shape[1]
    gm, gn, gk = M // tm, N // tn, K // tk
    multi_k = gk > 1

    in_specs = [
        pl.BlockSpec((tm, tk), lambda i, j, k: (i, k)),   # x  [M, K]
        pl.BlockSpec((tk, tn), lambda i, j, k: (k, j)),   # W  [K, N] (pre-transposed)
    ]
    args = [x2d, w_kn]
    if has_bias:
        in_specs.append(pl.BlockSpec((1, tn), lambda i, j, k: (0, j)))
        args.append(bias)

    scratch = [pltpu.VMEM((tm, tn), jnp.float32)] if multi_k else []

    itemsize = jnp.dtype(x2d.dtype).itemsize
    cost = pl.CostEstimate(
        flops=2 * M * N * K,
        transcendentals=0,
        # account for re-streaming: x read gn times, W read gm times
        bytes_accessed=(gn * M * K + gm * N * K + M * N) * itemsize,
    )

    return pl.pallas_call(
        _make_kernel(multi_k, has_bias),
        out_shape=jax.ShapeDtypeStruct((M, N), x2d.dtype),
        grid_spec=pltpu.PrefetchScalarGridSpec(
            num_scalar_prefetch=0,
            grid=(gm, gn, gk),
            in_specs=in_specs,
            out_specs=pl.BlockSpec((tm, tn), lambda i, j, k: (i, j)),
            scratch_shapes=scratch,
        ),
        compiler_params=pltpu.CompilerParams(
            dimension_semantics=("parallel", "parallel", "arbitrary"),
            vmem_limit_bytes=vmem_limit,
        ),
        cost_estimate=cost,
    )(*args)


# ---------------------------------------------------------------------------
# Forward from preprocessed ([K, N] padded) weight.
# ---------------------------------------------------------------------------
def _linear_from_kn(x, w_kn_padded, bias_row, out_features, *, tn, tk, Kp, Np, config):
    tm_pref, _, _, vmem_limit, split_mc = config
    in_features = x.shape[-1]
    lead_shape = x.shape[:-1]
    M = 1
    for d in lead_shape:
        M *= d
    x2d = x.reshape(M, in_features)

    tm, Mp = _choose_tile(M, tm_pref, 16)

    # Megacore (2-TC) chips: guarantee >=2 blocks on a parallel axis so
    # decode-style (1, 1, gk) grids don't idle half the chip.
    gm, gn = Mp // tm, Np // tn
    if split_mc and gm == 1 and gn == 1:
        if tn % 256 == 0:
            tn = tn // 2
        elif tm % 16 == 0:
            tm = tm // 2

    if Mp != M or Kp != in_features:
        x2d = jnp.pad(x2d, ((0, Mp - M), (0, Kp - in_features)))

    y2d = _pallas_linear_2d(
        x2d, w_kn_padded, bias_row,
        tm=tm, tn=tn, tk=tk, has_bias=bias_row is not None,
        vmem_limit=vmem_limit,
    )
    if Mp != M or Np != out_features:
        y2d = y2d[:M, :out_features]
    return y2d.reshape(*lead_shape, out_features)


def _preprocess_weight(weight, bias, tn_pref, tk_pref):
    """Transpose torch-layout weight to [K, N], zero-pad to tile multiples."""
    out_features, in_features = weight.shape
    tn, Np = _choose_tile(out_features, tn_pref, 128)
    tk, Kp = _choose_tile(in_features, tk_pref, 128)
    w_kn = jnp.transpose(weight)                      # [K, N], MXU-native
    if (Kp, Np) != (in_features, out_features):
        w_kn = jnp.pad(w_kn, ((0, Kp - in_features), (0, Np - out_features)))
    b_row = None
    if bias is not None:
        b_row = bias.reshape(1, out_features).astype(jnp.float32)
        if Np != out_features:
            b_row = jnp.pad(b_row, ((0, 0), (0, Np - out_features)))
    return w_kn, b_row, tn, tk, Kp, Np


def linear_pallas(x, weight, bias=None):
    """y = x @ weight.T (+ bias), matching torch.nn.functional.linear.

    `weight` is in PyTorch layout [out_features, in_features]. This functional
    entry point transposes/pads per call; `LinearPallas` amortizes that at init.
    """
    out_features, in_features = weight.shape
    assert x.shape[-1] == in_features
    config = _TILE_CONFIG[_tpu_generation()]
    _, tn_pref, tk_pref, _, _ = config
    w_kn, b_row, tn, tk, Kp, Np = _preprocess_weight(weight, bias, tn_pref, tk_pref)
    return _linear_from_kn(x, w_kn, b_row, out_features,
                           tn=tn, tk=tk, Kp=Kp, Np=Np, config=config)


class LinearPallas:
    """JAX/Pallas mirror of the PyTorch `Linear` module (bf16 weights).

    Weight dtype is bf16 (element_size > 1), so the fp8_gemm / weight_dequant
    quantized branches of `linear` are never taken.
    """

    dtype = jnp.bfloat16

    def __init__(self, in_features, out_features, bias=False, dtype=None, key=None):
        self.in_features = in_features
        self.out_features = out_features
        dtype = dtype or LinearPallas.dtype
        key = key if key is not None else jax.random.PRNGKey(0)
        wkey, bkey = jax.random.split(key)
        bound = 1.0 / (in_features ** 0.5)
        # PyTorch layout [out_features, in_features] kept for parity / export.
        self.weight = jax.random.uniform(
            wkey, (out_features, in_features), minval=-bound, maxval=bound,
            dtype=jnp.float32,
        ).astype(dtype)
        if bias:
            self.bias = jax.random.uniform(
                bkey, (out_features,), minval=-bound, maxval=bound,
                dtype=jnp.float32,
            )
        else:
            self.bias = None

        # One-time preprocessing: transpose to [K, N] + zero-pad to tile
        # multiples so no per-call HBM transpose/pad pass over the weight.
        self._config = _TILE_CONFIG[_tpu_generation()]
        _, tn_pref, tk_pref, _, _ = self._config
        (self._w_kn, self._b_row, self._tn, self._tk,
         self._Kp, self._Np) = _preprocess_weight(self.weight, self.bias,
                                                  tn_pref, tk_pref)

    def __call__(self, x):
        return _linear_from_kn(x, self._w_kn, self._b_row, self.out_features,
                               tn=self._tn, tk=self._tk,
                               Kp=self._Kp, Np=self._Np, config=self._config)


if __name__ == "__main__":
    key = jax.random.PRNGKey(0)
    k_x, k_mod, k_x2, k_mod2, k_x3, k_mod3 = jax.random.split(key, 6)

    # --- primary small case (module default: bias=False) ---
    batch, seq, in_features, out_features = 2, 8, 32, 64
    x = jax.random.normal(k_x, (batch, seq, in_features)).astype(jnp.bfloat16)
    layer = LinearPallas(in_features, out_features, bias=False, key=k_mod)
    y = jax.block_until_ready(layer(x))
    y_ref = jnp.dot(
        x.astype(jnp.float32), layer.weight.astype(jnp.float32).T
    ).astype(jnp.bfloat16)
    assert y.shape == (batch, seq, out_features)
    assert y.dtype == jnp.bfloat16
    err = jnp.max(jnp.abs(y.astype(jnp.float32) - y_ref.astype(jnp.float32)))
    assert float(err) < 1e-1, f"mismatch: {err}"

    # --- multi-K-step (accumulator) + fused-bias path ---
    in2, out2 = 2048, 64
    x2 = jax.random.normal(k_x2, (batch, seq, in2)).astype(jnp.bfloat16)
    layer2 = LinearPallas(in2, out2, bias=True, key=k_mod2)
    y2 = jax.block_until_ready(layer2(x2))
    y2_ref = (
        jnp.dot(x2.astype(jnp.float32), layer2.weight.astype(jnp.float32).T)
        + layer2.bias[None, None, :]
    ).astype(jnp.bfloat16)
    err2 = jnp.max(jnp.abs(y2.astype(jnp.float32) - y2_ref.astype(jnp.float32)))
    assert float(err2) < 5e-1, f"mismatch (multi-K/bias): {err2}"

    # --- ragged-K case through the functional torch-layout entry point ---
    in3, out3 = 520, 192   # K > tk_pref and not a 128-multiple -> zero padding
    x3 = (jax.random.normal(k_x3, (3, in3))).astype(jnp.bfloat16)
    w3 = (jax.random.normal(k_mod3, (out3, in3)) * 0.05).astype(jnp.bfloat16)
    y3 = jax.block_until_ready(linear_pallas(x3, w3))
    y3_ref = jnp.dot(
        x3.astype(jnp.float32), w3.astype(jnp.float32).T
    ).astype(jnp.bfloat16)
    err3 = jnp.max(jnp.abs(y3.astype(jnp.float32) - y3_ref.astype(jnp.float32)))
    assert y3.shape == (3, out3)
    assert float(err3) < 2e-1, f"mismatch (ragged-K): {err3}"

    print("KERNEL_OK")
</pallas_src>

<mosaic_0001>
module attributes {stable_mosaic.version = 11 : i64} {
  func.func @kernel(%arg0: i32, %arg1: i32, %arg2: i32, %arg3: memref<8x32xbf16, #tpu.memory_space<vmem>>, %arg4: memref<32x64xbf16, #tpu.memory_space<vmem>>, %arg5: memref<8x64xbf16, #tpu.memory_space<vmem>>) attributes {dimension_semantics = [#tpu.dimension_semantics<parallel>, #tpu.dimension_semantics<parallel>, #tpu.dimension_semantics<arbitrary>], iteration_bounds = array<i64: 2, 1, 1>, scalar_prefetch = 0 : i64, scratch_operands = 0 : i64, tpu.core_type = #tpu.core_type<tc>, window_params = [{transform_indices = @transform_0, window_bounds = array<i64: 8, 32>}, {transform_indices = @transform_1, window_bounds = array<i64: 32, 64>}, {transform_indices = @transform_2, window_bounds = array<i64: 8, 64>}]} {
    %c0 = arith.constant 0 : index
    %c0_0 = arith.constant 0 : index
    %0 = vector.load %arg3[%c0, %c0_0] : memref<8x32xbf16, #tpu.memory_space<vmem>>, vector<8x32xbf16>
    %c0_1 = arith.constant 0 : index
    %c0_2 = arith.constant 0 : index
    %1 = vector.load %arg4[%c0_1, %c0_2] : memref<32x64xbf16, #tpu.memory_space<vmem>>, vector<32x64xbf16>
    %cst = arith.constant dense<0.000000e+00> : vector<8x64xf32>
    %2 = tpu.matmul %0, %1, %cst {dimension_numbers = #tpu.dot_dimension_numbers<[1], [0], [0], [1], [0, 0, 1, 1], [], []>} : vector<8x32xbf16>, vector<32x64xbf16>, vector<8x64xf32> -> vector<8x64xf32>
    %3 = arith.truncf %2 : vector<8x64xf32> to vector<8x64xbf16>
    %c0_3 = arith.constant 0 : index
    %c0_4 = arith.constant 0 : index
    %4 = vector.load %arg5[%c0_3, %c0_4] : memref<8x64xbf16, #tpu.memory_space<vmem>>, vector<8x64xbf16>
    tpu.vector_store %arg5[%c0_3, %c0_4], %3 {strides = array<i32>} : memref<8x64xbf16, #tpu.memory_space<vmem>>, vector<8x64xbf16>,
    return
  }
  func.func @transform_0(%arg0: i32, %arg1: i32, %arg2: i32) -> (i32, i32) {
    %c0_i32 = arith.constant 0 : i32
    return %arg0, %arg2 : i32, i32
  }
  func.func @transform_1(%arg0: i32, %arg1: i32, %arg2: i32) -> (i32, i32) {
    %c0_i32 = arith.constant 0 : i32
    return %arg2, %arg1 : i32, i32
  }
  func.func @transform_2(%arg0: i32, %arg1: i32, %arg2: i32) -> (i32, i32) {
    %c0_i32 = arith.constant 0 : i32
    return %arg0, %arg1 : i32, i32
  }
}

</mosaic_0001>

<llo_original>
// kernel: _pallas_linear_2d.1
$region0: #{_pallas_linear_2d.1}
  #allocation0 [shape = 'u32[]', space=smem, size = 0x4, offset = 0x4, fixed_abs, tag = 'smem constant byte address 0x4 - core index']
  #allocation1 [shape = 'u32[72,128]{1,0:T(1,128)}', space=vmem, size = 0x9000, scoped, tag = 'internal scratch']
  %s0 = inlined_call_operand.hbm [shape: bf16[16,32], index: 0, kind: input, shape index: {}]
  %s1 = inlined_call_operand.hbm [shape: bf16[32,64], index: 1, kind: input, shape index: {}]
  %s2 = inlined_call_operand.hbm [shape: bf16[16,64], index: 2, kind: output, shape index: {}]
  %s3 = sld [smem:[#allocation0]]
  $region49: #{_pallas_linear_2d.1} parent=0
    _
  %s5 = ssub.s32 1, %s3
  %s6 = scalar_select 0, %s5, %s3
  $region1: #{_pallas_linear_2d.1} parent=0
    #allocation2 [shape = 'u8[4096]{0}', space=vmem, size = 0x1000, scoped, tag = 'input window, operand 0']
    #allocation3 [shape = 's32[2]{0}', space=sflag, size = 0x8, scoped, tag = 'scoped memory for _pallas_linear_2d.1']
    #allocation4 [shape = 's32[2]{0}', space=sflag, size = 0x8, scoped, tag = 'scoped memory for _pallas_linear_2d.1']
    #allocation5 [shape = 'u8[8192]{0}', space=vmem, size = 0x2000, scoped, tag = 'input window, operand 1, single buffered']
    #allocation6 [shape = 's32[1]{0}', space=sflag, size = 0x4, scoped, tag = 'scoped memory for _pallas_linear_2d.1']
    #allocation7 [shape = 'u8[4096]{0}', space=vmem, size = 0x1000, scoped, tag = 'output window, operand 0']
    %7 = vsyncpa [#allocation3], 0
    %s8 = scalar_lea.sflag [#allocation3], 1
    %9 = vsyncpa %s8, 0
    %10 = vsyncpa [#allocation6], 0
    %11 = vsyncpa [#allocation4], 0
    %s12 = scalar_lea.sflag [#allocation4], 1
    %13 = vsyncpa %s12, 0
    loop: start=0, step=1, limit=4
    $region2: #{_pallas_linear_2d.1} parent=1 // loop_pre_header
      _
    $region3: #{_pallas_linear_2d.1} parent=1 // loop_header
      %s15 = sphi 0, %s19
      %p16 = scmp.ge.s32.totalorder %s15, 4
      %s22 = sphi 0, %s41
      %s23 = sphi 0, %s37
      %s24 = sphi 0, %s33
      %s25 = sphi 0, %s22
      %s26 = sphi 0, %s23
      %s27 = sphi 0, %s24
      %s28 = sphi 0, %s25
      %s29 = sphi 0, %s26
      %s30 = sphi 0, %s27
      %s46 = sphi 0, %s48
      %s49 = sphi 0, %s46
      %s50 = sphi 0, %s49
      %s66 = sphi 0, %s50
      %s74 = sphi 0, %s76
      %s77 = sphi 0, %s74
      %s78 = sphi 0, %s77
      %s94 = sphi 0, %s78
      %s102 = sphi 0, %s104
      %s105 = sphi 0, %s102
      %s106 = sphi 0, %s105
      %s122 = sphi 0, %s106
    $region4: #{_pallas_linear_2d.1} parent=1 // loop_header_branch
      %18 = sbr.rel (%p16) target = $region8
    $region5: #{_pallas_linear_2d.1} parent=1 // loop_body
      %s20 = ssub.s32 %s15, 1
      %s21 = ssub.s32 %s15, 2
      %s31 = sadd.s32 1, %s24
      %p32 = scmp.ge.s32.totalorder %s31, 1
      %s33 = scalar_select %p32, 0, %s31
      %s34 = sadd.s32 1, %s23
      %s35 = scalar_select %p32, %s34, %s23
      %p36 = scmp.ge.s32.totalorder %s35, 1
      %s37 = scalar_select %p36, 0, %s35
      %s38 = sadd.s32 1, %s22
      %s39 = scalar_select %p36, %s38, %s22
      %p40 = scmp.ge.s32.totalorder %s39, 2
      %s41 = scalar_select %p40, 0, %s39
      %s42 = ssub.s32 %s22, %s41
      %s43 = ssub.s32 %s24, %s33
      %s44 = sor.u32 %s42, %s43
      %p45 = scmp.eq.s32.totalorder %s44, 0
      %s47 = sadd.s32 %s46, 1
      %s48 = scalar_select %p45, %s46, %s47
      %p51 = pneg %p45
      %p52 = scmp.eq.s32.totalorder %s15, 1
      %p53 = por %p51, %p52
      %p54 = scmp.ne.s32.totalorder %s46, %s49
      %p55 = scmp.eq.s32.totalorder %s15, 0
      %p56 = por %p54, %p55
      %p57 = scmp.ne.s32.totalorder %s46, %s49
      %p58 = scmp.eq.s32.totalorder %s20, 1
      %p59 = por %p57, %p58
      %p60 = scmp.ne.s32.totalorder %s49, %s50
      %p61 = scmp.eq.s32.totalorder %s20, 0
      %p62 = por %p60, %p61
      %p63 = scmp.ne.s32.totalorder %s49, %s50
      %p64 = scmp.eq.s32.totalorder %s21, 1
      %p65 = por %p63, %p64
      %p67 = scmp.ne.s32.totalorder %s50, %s66
      %p68 = scmp.eq.s32.totalorder %s21, 0
      %p69 = por %p67, %p68
      %s70 = ssub.s32 %s24, %s33
      %s71 = ssub.s32 %s23, %s37
      %s72 = sor.u32 %s70, %s71
      %p73 = scmp.eq.s32.totalorder %s72, 0
      %s75 = sadd.s32 %s74, 1
      %s76 = scalar_select %p73, %s74, %s75
      %p79 = pneg %p73
      %p80 = scmp.eq.s32.totalorder %s15, 1
      %p81 = por %p79, %p80
      %p82 = scmp.ne.s32.totalorder %s74, %s77
      %p83 = scmp.eq.s32.totalorder %s15, 0
      %p84 = por %p82, %p83
      %p85 = scmp.ne.s32.totalorder %s74, %s77
      %p86 = scmp.eq.s32.totalorder %s20, 1
      %p87 = por %p85, %p86
      %p88 = scmp.ne.s32.totalorder %s77, %s78
      %p89 = scmp.eq.s32.totalorder %s20, 0
      %p90 = por %p88, %p89
      %p91 = scmp.ne.s32.totalorder %s77, %s78
      %p92 = scmp.eq.s32.totalorder %s21, 1
      %p93 = por %p91, %p92
      %p95 = scmp.ne.s32.totalorder %s78, %s94
      %p96 = scmp.eq.s32.totalorder %s21, 0
      %p97 = por %p95, %p96
      %s98 = ssub.s32 %s22, %s41
      %s99 = ssub.s32 %s23, %s37
      %s100 = sor.u32 %s98, %s99
      %p101 = scmp.eq.s32.totalorder %s100, 0
      %s103 = sadd.s32 %s102, 1
      %s104 = scalar_select %p101, %s102, %s103
      %p107 = pneg %p101
      %p108 = scmp.eq.s32.totalorder %s15, 1
      %p109 = por %p107, %p108
      %p110 = scmp.ne.s32.totalorder %s102, %s105
      %p111 = scmp.eq.s32.totalorder %s15, 0
      %p112 = por %p110, %p111
      %p113 = scmp.ne.s32.totalorder %s102, %s105
      %p114 = scmp.eq.s32.totalorder %s20, 1
      %p115 = por %p113, %p114
      %p116 = scmp.ne.s32.totalorder %s105, %s106
      %p117 = scmp.eq.s32.totalorder %s20, 0
      %p118 = por %p116, %p117
      %p119 = scmp.ne.s32.totalorder %s105, %s106
      %p120 = scmp.eq.s32.totalorder %s21, 1
      %p121 = por %p119, %p120
      %p123 = scmp.ne.s32.totalorder %s106, %s122
      %p124 = scmp.eq.s32.totalorder %s21, 0
      %p125 = por %p123, %p124
      %p126 = scmp.le.s32.totalorder 1, %s15
      %p127 = scmp.lt.s32.totalorder %s15, 3
      %p128 = pnand %p126, %p127
      %p129 = pneg %p128
      // Predicated region
      $region9: #{_pallas_linear_2d.1} parent=5 // pred_check
        _
      $region10: #{_pallas_linear_2d.1} parent=5 // pred_check_branch
        %131 = sbr.rel (%p128) target = $region12
      $region11: #{_pallas_linear_2d.1} parent=5 // pred_region
        %s132 = ssub.s32 %s15, 1
        // Predicated region
        $region13: #{_pallas_linear_2d.1} parent=11 // pred_check
          %p133 = pneg %p90
        $region14: #{_pallas_linear_2d.1} parent=11 // pred_check_branch
          %135 = sbr.rel (%p133) target = $region16
        $region15: #{_pallas_linear_2d.1} parent=11 // pred_region
          %s136 = smul.u32 4, %s27
          %138 = vsyncadd [#allocation6], 0
          %s139 = sadd.s32 %s26, %s136
          %s140 = smul.addr %s139, 4
          %s141 = scalar_lea.hbm %s1, %s140
          %s142 = sshll.u32 %s141, 4
          %s143 = int_to_ptr.hbm [resolvable:$true] %s142
          %s144 = sshll.u32 [#allocation5], 4
          %s145 = int_to_ptr.vmem [resolvable:$true] %s144
          %150 = dma.hbm_to_vmem [thread:$0]  %s143, 256, %s145, [#allocation6], 64, 64, 4
        $region16: #{_pallas_linear_2d.1} parent=11 // pred_fallthru
          _
      $region12: #{_pallas_linear_2d.1} parent=5 // pred_fallthru
        _
      %p151 = scmp.lt.s32.totalorder %s15, 2
      // Predicated region
      $region17: #{_pallas_linear_2d.1} parent=5 // pred_check
        %p152 = pneg %p151
      $region18: #{_pallas_linear_2d.1} parent=5 // pred_check_branch
        %154 = sbr.rel (%p152) target = $region20
      $region19: #{_pallas_linear_2d.1} parent=5 // pred_region
        // Predicated region
        $region21: #{_pallas_linear_2d.1} parent=19 // pred_check
          %p155 = pneg %p56
        $region22: #{_pallas_linear_2d.1} parent=19 // pred_check_branch
          %157 = sbr.rel (%p155) target = $region24
        $region23: #{_pallas_linear_2d.1} parent=19 // pred_region
          %s158 = sand.u32 %s46, 1
          %s159 = scalar_lea.sflag [#allocation3], %s158
          %s160 = sand.u32 %s46, 1
          %s161 = smul.addr %s160, 4
          %s162 = scalar_lea.vmem [#allocation2], %s161
          %164 = vsyncadd %s159, 0
          %s165 = sadd.s32 %s24, %s22
          %s166 = smul.addr %s165, 4
          %s167 = scalar_lea.hbm %s0, %s166
          %s169 = sshll.u32 %s167, 4
          %s170 = int_to_ptr.hbm [resolvable:$true] %s169
          %s171 = sshll.u32 %s162, 4
          %s172 = int_to_ptr.vmem [resolvable:$true] %s171
          %174 = dma.hbm_to_vmem [thread:$0]  %s170, 64, %s172, %s159
        $region24: #{_pallas_linear_2d.1} parent=19 // pred_fallthru
          _
      $region20: #{_pallas_linear_2d.1} parent=5 // pred_fallthru
        _
      %p175 = scmp.le.s32.totalorder 1, %s15
      %p176 = scmp.lt.s32.totalorder %s15, 3
      %p177 = pnand %p175, %p176
      %p178 = pneg %p177
      // Predicated region
      $region25: #{_pallas_linear_2d.1} parent=5 // pred_check
        _
      $region26: #{_pallas_linear_2d.1} parent=5 // pred_check_branch
        %180 = sbr.rel (%p177) target = $region28
      $region27: #{_pallas_linear_2d.1} parent=5 // pred_region
        %s181 = ssub.s32 %s15, 1
        %s182 = sand.u32 %s49, 1
        %s183 = scalar_lea.sflag [#allocation3], %s182
        %s184 = sand.u32 %s49, 1
        %s185 = smul.addr %s184, 4
        %s186 = scalar_lea.vmem [#allocation2], %s185
        // Predicated region
        $region29: #{_pallas_linear_2d.1} parent=27 // pred_check
          %p187 = pneg %p62
        $region30: #{_pallas_linear_2d.1} parent=27 // pred_check_branch
          %189 = sbr.rel (%p187) target = $region32
        $region31: #{_pallas_linear_2d.1} parent=27 // pred_region
          %191 = dma.done %s183, 64
        $region32: #{_pallas_linear_2d.1} parent=27 // pred_fallthru
          _
        // Predicated region
        $region33: #{_pallas_linear_2d.1} parent=27 // pred_check
          %p192 = pneg %p90
        $region34: #{_pallas_linear_2d.1} parent=27 // pred_check_branch
          %194 = sbr.rel (%p192) target = $region36
        $region35: #{_pallas_linear_2d.1} parent=27 // pred_region
          %196 = dma.done [#allocation6], 256
        $region36: #{_pallas_linear_2d.1} parent=27 // pred_fallthru
          _
        %s197 = sand.u32 %s49, 1
        %s198 = scalar_lea.sflag [#allocation3], %s197
        %s199 = sand.u32 %s49, 1
        %s200 = smul.addr %s199, 4
        %s201 = scalar_lea.vmem [#allocation2], %s200
        %p202 = pneg %p62
        %p203 = pneg %p59
        %p204 = pneg %p90
        %p205 = pneg %p87
        %p206 = pneg %p118
        %p207 = pneg %p115
        %s208 = sand.u32 %s105, 1
        %s209 = scalar_lea.sflag [#allocation4], %s208
        %s210 = sand.u32 %s105, 1
        %s211 = smul.addr %s210, 4
        %s212 = scalar_lea.vmem [#allocation7], %s211
        %s213 = smul.u32 4, %s27
        %v215 = vld [vmem:[%s186] sm:$0xf]
        %v216 = vld [vmem:[#allocation5] sm:$0xf]
        %v217 = vld [vmem:[#allocation5 + $0x4] sm:$0xf]
        %v218 = vld [vmem:[#allocation5 + $0x8] sm:$0xf]
        %v219 = vld [vmem:[#allocation5 + $0xc] sm:$0xf]
        %v224 = vunpack.c.l.b16 %v216
        %v225 = vunpack.c.l.b16 %v217
        %v226 = vunpack.c.l.b16 %v218
        %v227 = vunpack.c.l.b16 %v219
        %v228 = vpack.c.b16 %v225, %v224
        %v229 = vpack.c.b16 %v227, %v226
        %vm232 = vcmask 261120
        %v234 = vsel %vm232, %v215, 0
        %236 = vmatpush.bf16.msra.mxu0 0
        %237 = vmatpush.bf16.msra.mxu0 0
        %238 = vmatpush.bf16.msra.mxu0 0
        %239 = vmatpush.bf16.msra.mxu0 0
        %240 = vmatpush.bf16.msra.mxu0 0
        %241 = vmatpush.bf16.msra.mxu0 0
        %242 = vmatpush.bf16.msra.mxu0 %v229
        %243 = vmatpush.bf16.msra.mxu0 %v228
        %244 = vmatmul.bf16.gmra.mxu0 %v234
        %v245 = vpop.f32.mrf.mxu0
        %v246 = vadd.f32 0.0, %v245
        %v247 = vpop.f32.mrf.mxu0
        %248 = vdwg.mxu0
        %v249 = vpack.c.bf16 %v246, %v246
        %vm250 = vcmask 519168
        %251 = vst.msk [vmem:[%s212] sm:$0xf] %vm250, %v249
        %s252 = sand.u32 %s105, 1
        %s253 = scalar_lea.sflag [#allocation4], %s252
        %s254 = sand.u32 %s105, 1
        %s255 = smul.addr %s254, 4
        %s256 = scalar_lea.vmem [#allocation7], %s255
        // Predicated region
        $region37: #{_pallas_linear_2d.1} parent=27 // pred_check
          %p257 = pneg %p115
        $region38: #{_pallas_linear_2d.1} parent=27 // pred_check_branch
          %259 = sbr.rel (%p257) target = $region40
        $region39: #{_pallas_linear_2d.1} parent=27 // pred_region
          %261 = vsyncadd %s253, 0
          %s262 = sadd.s32 %s26, %s25
          %s263 = smul.addr %s262, 4
          %s264 = scalar_lea.hbm %s2, %s263
          %s266 = sshll.u32 %s256, 4
          %s267 = int_to_ptr.vmem [resolvable:$true] %s266
          %s268 = sshll.u32 %s264, 4
          %s269 = int_to_ptr.hbm [resolvable:$true] %s268
          %271 = dma.vmem_to_hbm [thread:$0]  %s267, 64, %s269, %s253
        $region40: #{_pallas_linear_2d.1} parent=27 // pred_fallthru
          _
      $region28: #{_pallas_linear_2d.1} parent=5 // pred_fallthru
        _
      %p272 = scmp.le.s32.totalorder 2, %s15
      // Predicated region
      $region41: #{_pallas_linear_2d.1} parent=5 // pred_check
        %p273 = pneg %p272
      $region42: #{_pallas_linear_2d.1} parent=5 // pred_check_branch
        %275 = sbr.rel (%p273) target = $region44
      $region43: #{_pallas_linear_2d.1} parent=5 // pred_region
        %s276 = ssub.s32 %s15, 2
        // Predicated region
        $region45: #{_pallas_linear_2d.1} parent=43 // pred_check
          %p277 = pneg %p121
        $region46: #{_pallas_linear_2d.1} parent=43 // pred_check_branch
          %279 = sbr.rel (%p277) target = $region48
        $region47: #{_pallas_linear_2d.1} parent=43 // pred_region
          %s280 = sand.u32 %s106, 1
          %s281 = scalar_lea.sflag [#allocation4], %s280
          %s282 = sand.u32 %s106, 1
          %s283 = smul.addr %s282, 4
          %s284 = scalar_lea.vmem [#allocation7], %s283
          %286 = dma.done %s281, 64
        $region48: #{_pallas_linear_2d.1} parent=43 // pred_fallthru
          _
      $region44: #{_pallas_linear_2d.1} parent=5 // pred_fallthru
        _
    $region6: #{_pallas_linear_2d.1} parent=1 // loop_footer
      %s19 = sadd.s32 1, %s15
    $region7: #{_pallas_linear_2d.1} parent=1 // loop_footer_branch
      %14 = sbr.rel target = $region3
    $region8: #{_pallas_linear_2d.1} parent=1 // loop_exit
      _
    %287 = vsyncpa [#allocation3], 1
    %s288 = scalar_lea.sflag [#allocation3], 1
    %289 = vsyncpa %s288, 1
    %290 = vsyncpa [#allocation6], 1
    %291 = vsyncpa [#allocation4], 1
    %s292 = scalar_lea.sflag [#allocation4], 1
    %293 = vsyncpa %s292, 1

</llo_original>
